<compile_context>
chip_gen: v7x
topology: tpu7x:2x2x1
jax: 0.10.0
libtpu: 0.0.40
codegen_flags: <defaults>
</compile_context>

<pallas_src>
import functools
import math

import jax
import jax.numpy as jnp
import numpy as np
from jax.experimental import pallas as pl
from jax.experimental.pallas import tpu as pltpu

_LANE = 128
_SUBLANE = 8


def _round_up(v, m):
    return (v + m - 1) // m * m


def _sparsify1d_kernel(x_ref, t_ref, o_ref, *, n_valid):
    """One (block_b, Hp) tile: mask by per-row k-th-largest value + renormalize."""
    xf = x_ref[...].astype(jnp.float32)              # (TB, Hp)
    topval = t_ref[...].astype(jnp.float32)          # (TB, 1)

    # comp * x with ties kept, fused into a single select.  Padded -inf lanes
    # compare False and therefore contribute 0 to the row sum.
    res = jnp.where(xf >= topval, xf, 0.0)           # (TB, Hp)

    # res / (sum(res) / H)  ==  res * (H / sum(res))
    row_sum = jnp.sum(res, axis=-1, keepdims=True)   # (TB, 1)
    # Guard exact-zero sums: only the all-zero batch-padding rows hit this in
    # practice (PyTorch would emit NaN for a genuine all-zero row anyway).
    safe_sum = jnp.where(row_sum == 0.0, 1.0, row_sum)
    out = res * (jnp.float32(n_valid) / safe_sum)
    o_ref[...] = out.astype(o_ref.dtype)


def sparsify1d(x, sparse_ratio=0.5):
    """Pallas TPU implementation of Sparsify1D.forward for 2-D input (B, H)."""
    B, H = x.shape
    k = int(math.ceil(sparse_ratio * H))
    hp = _round_up(H, _LANE)

    # k-th-largest per-row threshold, hoisted out of the kernel (O(B*H*log k)
    # instead of the previous O(B*H^2) in-kernel pairwise count).
    topval = jax.lax.top_k(x, k)[0][:, k - 1:k]      # (B, 1)

    # Batch tile: multiple of 8 sublanes, sized so one f32 copy of the block
    # stays within ~2 MiB (VMEM use is then deterministic and small for any H,
    # comfortably inside v7x's 64 MiB with double-buffered I/O), and capped so
    # there are >= 2 grid steps whenever the padded batch allows (v7x megacore).
    copy_budget = 2 * 1024 * 1024
    max_bb = max(_SUBLANE, (copy_budget // (hp * 4)) // _SUBLANE * _SUBLANE)
    b8 = _round_up(B, _SUBLANE)
    block_b = min(b8, 1024, max_bb)
    if b8 >= 2 * _SUBLANE:
        block_b = min(block_b, max(_SUBLANE, (b8 // 2) // _SUBLANE * _SUBLANE))
    bp = _round_up(B, block_b)

    # Pad lanes with -inf (never selected, contributes 0 to the row sum),
    # then pad batch rows with zeros (their outputs are sliced off below).
    xp = x
    if hp != H:
        xp = jnp.pad(xp, ((0, 0), (0, hp - H)), constant_values=-jnp.inf)
    if bp != B:
        xp = jnp.pad(xp, ((0, bp - B), (0, 0)))
        topval = jnp.pad(topval, ((0, bp - B), (0, 0)))

    itemsize = x.dtype.itemsize
    # Double-buffered input/output blocks + f32 intermediates + headroom.
    vmem_bytes = (4 * block_b * hp * itemsize
                  + 3 * block_b * hp * 4
                  + 4 * block_b * 4
                  + 2 * 1024 * 1024)
    vmem_limit = int(min(max(vmem_bytes, 16 * 1024 * 1024), 40 * 1024 * 1024))

    kernel = functools.partial(_sparsify1d_kernel, n_valid=H)
    out = pl.pallas_call(
        kernel,
        out_shape=jax.ShapeDtypeStruct((bp, hp), x.dtype),
        grid=(bp // block_b,),
        in_specs=[pl.BlockSpec((block_b, hp), lambda i: (i, 0)),
                  pl.BlockSpec((block_b, 1), lambda i: (i, 0))],
        out_specs=pl.BlockSpec((block_b, hp), lambda i: (i, 0)),
        compiler_params=pltpu.CompilerParams(
            dimension_semantics=("parallel",),
            vmem_limit_bytes=vmem_limit),
    )(xp, topval)
    return out[:B, :H]


def _reference(x, sparse_ratio=0.5):
    """Pure-JAX reference mirroring the PyTorch forward."""
    B, H = x.shape
    k = int(math.ceil(sparse_ratio * H))
    topk_vals, _ = jax.lax.top_k(x, k)           # (B, k), sorted desc
    topval = topk_vals[:, -1:]                   # (B, 1) -> k-th largest
    comp = (x >= topval).astype(x.dtype)
    res = comp * x
    res = res / (jnp.sum(res, axis=-1, keepdims=True) / H)
    return res


if __name__ == "__main__":
    key = jax.random.PRNGKey(0)

    # Case 1: small, lane-aligned-after-padding (B=8, H=32).
    B, H = 8, 32
    x = jax.random.normal(key, (B, H), dtype=jnp.float32)
    out = jax.block_until_ready(sparsify1d(x, sparse_ratio=0.5))
    ref = _reference(x, sparse_ratio=0.5)
    assert out.shape == (B, H) and out.dtype == x.dtype
    np.testing.assert_allclose(np.asarray(out), np.asarray(ref),
                               rtol=1e-5, atol=1e-5)

    # Case 2: exercises lane padding (H=200 -> 256) and batch padding (B=5 -> 8).
    B2, H2 = 5, 200
    x2 = jax.random.normal(jax.random.PRNGKey(1), (B2, H2), dtype=jnp.float32)
    out2 = jax.block_until_ready(sparsify1d(x2, sparse_ratio=0.5))
    ref2 = _reference(x2, sparse_ratio=0.5)
    assert out2.shape == (B2, H2) and out2.dtype == x2.dtype
    np.testing.assert_allclose(np.asarray(out2), np.asarray(ref2),
                               rtol=1e-5, atol=1e-5)

    # Case 3: larger batch so the grid has >= 2 parallel steps (megacore path).
    B3, H3 = 24, 128
    x3 = jax.random.normal(jax.random.PRNGKey(2), (B3, H3), dtype=jnp.float32)
    out3 = jax.block_until_ready(sparsify1d(x3, sparse_ratio=0.25))
    ref3 = _reference(x3, sparse_ratio=0.25)
    assert out3.shape == (B3, H3) and out3.dtype == x3.dtype
    np.testing.assert_allclose(np.asarray(out3), np.asarray(ref3),
                               rtol=1e-5, atol=1e-5)

    print("KERNEL_OK")
</pallas_src>

<mosaic_0001>
module attributes {stable_mosaic.version = 11 : i64} {
  func.func @_sparsify1d_kernel(%arg0: i32, %arg1: memref<8x128xf32, #tpu.memory_space<vmem>>, %arg2: memref<8x1xf32, #tpu.memory_space<vmem>>, %arg3: memref<8x128xf32, #tpu.memory_space<vmem>>) attributes {dimension_semantics = [#tpu.dimension_semantics<parallel>], iteration_bounds = array<i64: 1>, scalar_prefetch = 0 : i64, scratch_operands = 0 : i64, tpu.core_type = #tpu.core_type<tc>, window_params = [{transform_indices = @transform_0, window_bounds = array<i64: 8, 128>}, {transform_indices = @transform_1, window_bounds = array<i64: 8, 1>}, {transform_indices = @transform_2, window_bounds = array<i64: 8, 128>}]} {
    %c0 = arith.constant 0 : index
    %c0_0 = arith.constant 0 : index
    %0 = vector.load %arg1[%c0, %c0_0] : memref<8x128xf32, #tpu.memory_space<vmem>>, vector<8x128xf32>
    %c0_1 = arith.constant 0 : index
    %c0_2 = arith.constant 0 : index
    %1 = vector.load %arg2[%c0_1, %c0_2] : memref<8x1xf32, #tpu.memory_space<vmem>>, vector<8x1xf32>
    %2 = vector.broadcast %1 : vector<8x1xf32> to vector<8x128xf32>
    %3 = arith.cmpf oge, %0, %2 : vector<8x128xf32>
    %cst = arith.constant 0.000000e+00 : f32
    %4 = vector.broadcast %cst : f32 to vector<8x128xf32>
    %5 = arith.select %3, %0, %4 : vector<8x128xi1>, vector<8x128xf32>
    %cst_3 = arith.constant dense<0.000000e+00> : vector<8xf32>
    %6 = vector.multi_reduction <add>, %5, %cst_3 [1] : vector<8x128xf32> to vector<8xf32>
    %7 = vector.shape_cast %6 : vector<8xf32> to vector<8x1xf32>
    %cst_4 = arith.constant 0.000000e+00 : f32
    %8 = vector.broadcast %cst_4 : f32 to vector<8x1xf32>
    %9 = arith.cmpf oeq, %7, %8 : vector<8x1xf32>
    %cst_5 = arith.constant 1.000000e+00 : f32
    %10 = vector.broadcast %cst_5 : f32 to vector<8x1xf32>
    %11 = arith.select %9, %10, %7 : vector<8x1xi1>, vector<8x1xf32>
    %cst_6 = arith.constant 3.200000e+01 : f32
    %12 = vector.broadcast %cst_6 : f32 to vector<8x1xf32>
    %13 = arith.divf %12, %11 : vector<8x1xf32>
    %14 = vector.broadcast %13 : vector<8x1xf32> to vector<8x128xf32>
    %15 = arith.mulf %5, %14 : vector<8x128xf32>
    %c0_7 = arith.constant 0 : index
    %c0_8 = arith.constant 0 : index
    %16 = vector.load %arg3[%c0_7, %c0_8] : memref<8x128xf32, #tpu.memory_space<vmem>>, vector<8x128xf32>
    tpu.vector_store %arg3[%c0_7, %c0_8], %15 {strides = array<i32>} : memref<8x128xf32, #tpu.memory_space<vmem>>, vector<8x128xf32>,
    return
  }
  func.func @transform_0(%arg0: i32) -> (i32, i32) {
    %c0_i32 = arith.constant 0 : i32
    %c0_i32_0 = arith.constant 0 : i32
    return %arg0, %c0_i32 : i32, i32
  }
  func.func @transform_1(%arg0: i32) -> (i32, i32) {
    %c0_i32 = arith.constant 0 : i32
    %c0_i32_0 = arith.constant 0 : i32
    return %arg0, %c0_i32 : i32, i32
  }
  func.func @transform_2(%arg0: i32) -> (i32, i32) {
    %c0_i32 = arith.constant 0 : i32
    %c0_i32_0 = arith.constant 0 : i32
    return %arg0, %c0_i32 : i32, i32
  }
}

</mosaic_0001>

<llo_original>
// kernel: tpu_custom_call.1
$region0: #{tpu_custom_call.1}
  #allocation0 [shape = 'u32[]', space=smem, size = 0x4, offset = 0x4, fixed_abs, tag = 'smem constant byte address 0x4 - core index']
  #allocation1 [shape = 'u32[144,128]{1,0:T(1,128)}', space=vmem, size = 0x12000, scoped, tag = 'internal scratch']
  %s0 = inlined_call_operand.vmem [shape: f32[8,128], index: 0, kind: input, shape index: {}]
  %s1 = inlined_call_operand.vmem [shape: f32[8,1], index: 1, kind: input, shape index: {}]
  %s2 = inlined_call_operand.hbm [shape: f32[8,128], index: 2, kind: output, shape index: {}]
  %s3 = sld [smem:[#allocation0]]
  $region18: #{tpu_custom_call.1} parent=0
    _
  %s5 = ssub.s32 1, %s3
  %s6 = scalar_select 0, %s5, %s3
  $region1: #{tpu_custom_call.1} parent=0
    #allocation2 [shape = 'u8[4096]{0}', space=vmem, size = 0x1000, scoped, tag = 'output window, operand 0, single buffered']
    #allocation3 [shape = 's32[1]{0}', space=sflag, size = 0x4, scoped, tag = 'scoped memory for tpu_custom_call.1']
    %7 = vsyncpa [#allocation3], 0
    // Predicated region
    $region2: #{tpu_custom_call.1} parent=1 // pred_check
      _
    $region3: #{tpu_custom_call.1} parent=1 // pred_check_branch
      %9 = sbr.rel (0) target = $region5
    $region4: #{tpu_custom_call.1} parent=1 // pred_region
      _
    $region5: #{tpu_custom_call.1} parent=1 // pred_fallthru
      _
    // Predicated region
    $region6: #{tpu_custom_call.1} parent=1 // pred_check
      _
    $region7: #{tpu_custom_call.1} parent=1 // pred_check_branch
      %11 = sbr.rel (0) target = $region9
    $region8: #{tpu_custom_call.1} parent=1 // pred_region
      _
    $region9: #{tpu_custom_call.1} parent=1 // pred_fallthru
      _
    %v12 = vld [vmem:[%s0] sm:$0xff]
    %v13 = vld [vmem:[%s1] sm:$0xff]
    %15 = vset.pattern.permute.xlu0 0
    %16 = vperm.xlu0 %15, %v13
    %v17 = vpop.permute.xlu0 %16
    %vm19 = vcmp.ge.f32.partialorder %v12, %v17
    %v20 = vsel %vm19, %v12, 0.0
    %21 = vadd.xlane.f32.xlu0 %v20
    %v22 = vpop.xlane.xlu0 %21
    %vm23 = vcmp.eq.f32.partialorder %v22, 0.0
    %v24 = vsel %vm23, 1.0, %v22
    %v25 = vrcp.pop %v24
    %v26 = vmul.f32 32.0, %v25
    %v27 = vmul.f32 %v20, %v26
    %28 = vst [vmem:[#allocation2] sm:$0xff] %v27
    // Predicated region
    $region10: #{tpu_custom_call.1} parent=1 // pred_check
      _
    $region11: #{tpu_custom_call.1} parent=1 // pred_check_branch
      %30 = sbr.rel (0) target = $region13
    $region12: #{tpu_custom_call.1} parent=1 // pred_region
      %s32 = ssub.s32 128, 128
      %33 = vsyncadd [#allocation3], %s32
      %s35 = sshll.u32 [#allocation2], 4
      %s36 = int_to_ptr.vmem [resolvable:$true] %s35
      %38 = dma.vmem_to_hbm [thread:$0]  %s36, 128, %s2, [#allocation3]
    $region13: #{tpu_custom_call.1} parent=1 // pred_fallthru
      _
    // Predicated region
    $region14: #{tpu_custom_call.1} parent=1 // pred_check
      _
    $region15: #{tpu_custom_call.1} parent=1 // pred_check_branch
      %40 = sbr.rel (0) target = $region17
    $region16: #{tpu_custom_call.1} parent=1 // pred_region
      %41 = dma.done [#allocation3], 128
    $region17: #{tpu_custom_call.1} parent=1 // pred_fallthru
      _
    %42 = vsyncpa [#allocation3], 1

</llo_original>
